<compile_context>
chip_gen: v5e
topology: v5e:2x2
jax: 0.10.0
libtpu: 0.0.40
codegen_flags: <defaults>
</compile_context>

<pallas_src>
import jax
import jax.numpy as jnp
from jax.experimental import pallas as pl
from jax.experimental.pallas import tpu as pltpu


def se_depth_kernel(w_ref, b_ref, x_ref, o_ref):
    # w_ref: (1, C, 1)  VMEM f32, 1x1-conv weight (resident: constant block idx)
    # b_ref: (1,)       SMEM f32, conv bias (scalar)
    # x_ref: (Nb, C, T) VMEM tile: channels on sublanes, pixels on lanes
    # o_ref: (Nb, C, T) VMEM output tile
    x = x_ref[...]
    w = w_ref[...]                                     # (1, C, 1) f32
    b = b_ref[0]                                       # scalar from SMEM
    # Per-pixel 1x1 conv: f32 products + f32 accumulation over the channel
    # (sublane) axis.  This is the only full-tile f32 math (the reduce path).
    s = jnp.sum(x.astype(jnp.float32) * w, axis=1, keepdims=True) + b   # (Nb,1,T)
    ex = jax.nn.sigmoid(s)                             # (Nb, 1, T) f32
    # Gate multiply in the native dtype (bf16 VALU on v6e/v7x); only the tiny
    # (Nb, 1, T) gate is cast, never the whole tile.
    o_ref[...] = (ex.astype(x.dtype) * x).astype(o_ref.dtype)


_SUBLANE = {4: 8, 2: 16, 1: 32}   # dtype itemsize -> sublane tiling


def _round_up(x, m):
    return -(-x // m) * m


def _vmem_policy():
    """(pipeline-buffer budget, vmem_limit_bytes), sized per TPU generation."""
    phys = 64 << 20
    try:
        info = pltpu.get_tpu_info()
        phys = int(getattr(info, "vmem_capacity_bytes", phys))
    except Exception:
        pass
    if phys >= (96 << 20):            # v5e / v6e: 128 MiB physical VMEM
        return 24 << 20, 64 << 20
    return 16 << 20, 40 << 20         # v7x: 64 MiB physical VMEM per TC


def _choose_tiling(N, C, HW, dtype, budget_bytes, min_steps=4):
    """Pick (Nb, T_HW, block_bytes) from the real sublane-padded footprint."""
    itemsize = jnp.dtype(dtype).itemsize
    sublane = _SUBLANE.get(itemsize, 8)
    c_pad = _round_up(C, sublane)                # physical sublane padding
    row_bytes = c_pad * itemsize                 # one padded lane column, one batch
    # x in + out, each double-buffered -> 4 live copies of every block.
    target_block = max(budget_bytes // 4, 1)

    # Lane tile: as many 128-lane groups as fit a single-batch block.
    if HW <= 128:
        t_hw = HW                                 # full extent: always legal
    else:
        lanes = (target_block // row_bytes) // 128 * 128
        # 128 lanes is the minimum legal tile when splitting HW; if even that
        # exceeds the budget (huge C), the caller raises vmem_limit_bytes to
        # the actual requirement instead of over-subscribing silently.
        lanes = max(lanes, 128)
        t_hw = HW if lanes >= HW else lanes       # multiple of 128, or full HW
    t_pad = _round_up(t_hw, 128)

    # Small feature maps: fold batch elements into one block to amortize the
    # per-grid-step overhead, but keep several grid steps for v7x's two TCs.
    nb = 1
    if t_hw == HW:
        nb = max(1, min(N, target_block // max(row_bytes * t_pad, 1)))
        nb = min(nb, max(1, N // min(min_steps, N)))

    def steps(nb_, t_):
        return pl.cdiv(N, nb_) * pl.cdiv(HW, t_)

    # If the grid is still tiny (small N), shrink the lane tile so a
    # 'parallel' axis has >= min_steps where the problem allows.
    want = min(min_steps, N * pl.cdiv(HW, min(HW, 128)))
    while nb == 1 and t_hw > 128 and steps(nb, t_hw) < want:
        t_hw = max(128, _round_up(t_hw // 2, 128))

    block_bytes = nb * c_pad * _round_up(t_hw, 128) * itemsize
    return nb, t_hw, block_bytes


def se_depth(x_nchw, weight, bias):
    """x_nchw: (N, C, H, W); weight: (1, C, 1, 1); bias: (1,)  -> (N, C, H, W)"""
    N, C, H, W = x_nchw.shape
    HW = H * W

    budget, vmem_limit = _vmem_policy()
    nb, t_hw, block_bytes = _choose_tiling(N, C, HW, x_nchw.dtype, budget)

    # Free reshapes only (contiguous trailing dims): no transposes, no padding.
    x3 = x_nchw.reshape(N, C, HW)                      # (N, C, HW)
    w3 = weight.reshape(1, C, 1).astype(jnp.float32)   # resident VMEM tile
    b1 = bias.reshape(1).astype(jnp.float32)           # SMEM scalar

    grid = (pl.cdiv(N, nb), pl.cdiv(HW, t_hw))

    # Room for 2x(in + out) pipeline buffers + resident weight tile + Mosaic
    # internal scratch (f32 temporaries on the reduce path for bf16 inputs).
    required = 4 * block_bytes + _round_up(C, 8) * 128 * 4 + (2 << 20)
    vmem_limit = int(max(vmem_limit, required))

    # Note: ragged trailing tiles (HW or N not divisible by the block) read
    # unspecified data in the padded lanes/rows; the math is lane-local and
    # those positions are masked on writeback, so results are unaffected.
    out3 = pl.pallas_call(
        se_depth_kernel,
        out_shape=jax.ShapeDtypeStruct((N, C, HW), x_nchw.dtype),
        grid=grid,
        in_specs=[
            # weight: tiny, constant block index -> stays resident in VMEM
            pl.BlockSpec((1, C, 1), lambda n, t: (0, 0, 0)),
            # bias: scalar in SMEM, no VMEM tile / DMA traffic
            pl.BlockSpec(memory_space=pltpu.MemorySpace.SMEM),
            # x: Nb batches, full channel extent on sublanes, lane-dense HW tile
            pl.BlockSpec((nb, C, t_hw), lambda n, t: (n, 0, t)),
        ],
        out_specs=pl.BlockSpec((nb, C, t_hw), lambda n, t: (n, 0, t)),
        compiler_params=pltpu.CompilerParams(
            dimension_semantics=("parallel", "parallel"),
            vmem_limit_bytes=vmem_limit,
        ),
    )(w3, b1, x3)

    return out3.reshape(N, C, H, W)


def se_depth_reference(x_nchw, weight, bias):
    """Pure-JAX reference matching the PyTorch module."""
    s = jnp.einsum("nchw,oc->nohw", x_nchw, weight.reshape(1, -1)) \
        + bias.reshape(1, 1, 1, 1)
    ex = jax.nn.sigmoid(s)            # (N, 1, H, W)
    return ex * x_nchw                # broadcast over channels


if __name__ == "__main__":
    key = jax.random.PRNGKey(0)
    k_x, k_w, k_b = jax.random.split(key, 3)

    N, C, H, W = 2, 4, 16, 16
    x = jax.random.normal(k_x, (N, C, H, W), dtype=jnp.float32)

    # deterministic parameter init (mimics PyTorch's uniform fan-in init scale)
    fan_in = C  # 1x1 kernel
    bound = 1.0 / (fan_in ** 0.5)
    weight = jax.random.uniform(k_w, (1, C, 1, 1), minval=-bound, maxval=bound,
                                dtype=jnp.float32)
    bias = jax.random.uniform(k_b, (1,), minval=-bound, maxval=bound,
                              dtype=jnp.float32)

    out = se_depth(x, weight, bias)
    out = jax.block_until_ready(out)

    ref = se_depth_reference(x, weight, bias)
    assert out.shape == (N, C, H, W)
    assert jnp.allclose(out, ref, atol=1e-5, rtol=1e-5), "mismatch vs reference"

    print("KERNEL_OK")
</pallas_src>

<mosaic_0001>
module attributes {stable_mosaic.version = 11 : i64} {
  func.func @se_depth_kernel(%arg0: i32, %arg1: i32, %arg2: memref<1x4x1xf32, #tpu.memory_space<vmem>>, %arg3: memref<1xf32, #tpu.memory_space<smem>>, %arg4: memref<1x4x128xf32, #tpu.memory_space<vmem>>, %arg5: memref<1x4x128xf32, #tpu.memory_space<vmem>>) attributes {dimension_semantics = [#tpu.dimension_semantics<parallel>, #tpu.dimension_semantics<parallel>], iteration_bounds = array<i64: 2, 2>, scalar_prefetch = 0 : i64, scratch_operands = 0 : i64, tpu.core_type = #tpu.core_type<tc>, window_params = [{pipeline_mode = #tpu.pipeline_mode<synchronous>, transform_indices = @transform_0, window_bounds = array<i64: 1, 4, 1>}, {transform_indices = @transform_1, window_bounds = array<i64: 1>}, {transform_indices = @transform_2, window_bounds = array<i64: 1, 4, 128>}, {transform_indices = @transform_3, window_bounds = array<i64: 1, 4, 128>}]} {
    %c0 = arith.constant 0 : index
    %c0_0 = arith.constant 0 : index
    %c0_1 = arith.constant 0 : index
    %0 = vector.load %arg4[%c0, %c0_0, %c0_1] : memref<1x4x128xf32, #tpu.memory_space<vmem>>, vector<1x4x128xf32>
    %c0_2 = arith.constant 0 : index
    %c0_3 = arith.constant 0 : index
    %c0_4 = arith.constant 0 : index
    %1 = vector.load %arg2[%c0_2, %c0_3, %c0_4] : memref<1x4x1xf32, #tpu.memory_space<vmem>>, vector<1x4x1xf32>
    %c0_5 = arith.constant 0 : index
    %2 = memref.load %arg3[%c0_5] : memref<1xf32, #tpu.memory_space<smem>>
    %3 = vector.broadcast %1 : vector<1x4x1xf32> to vector<1x4x128xf32>
    %4 = arith.mulf %0, %3 : vector<1x4x128xf32>
    %cst = arith.constant dense<0.000000e+00> : vector<1x128xf32>
    %5 = vector.multi_reduction <add>, %4, %cst [1] : vector<1x4x128xf32> to vector<1x128xf32>
    %6 = vector.shape_cast %5 : vector<1x128xf32> to vector<1x1x128xf32>
    %7 = vector.broadcast %2 : f32 to vector<1x1x128xf32>
    %8 = arith.addf %6, %7 : vector<1x1x128xf32>
    %9 = arith.negf %8 : vector<1x1x128xf32>
    %10 = math.exp %9 : vector<1x1x128xf32>
    %cst_6 = arith.constant 1.000000e+00 : f32
    %11 = vector.broadcast %cst_6 : f32 to vector<1x1x128xf32>
    %12 = arith.addf %11, %10 : vector<1x1x128xf32>
    %13 = arith.divf %11, %12 : vector<1x1x128xf32>
    %14 = vector.broadcast %13 : vector<1x1x128xf32> to vector<1x4x128xf32>
    %15 = arith.mulf %14, %0 : vector<1x4x128xf32>
    %c0_7 = arith.constant 0 : index
    %c0_8 = arith.constant 0 : index
    %c0_9 = arith.constant 0 : index
    %16 = vector.load %arg5[%c0_7, %c0_8, %c0_9] : memref<1x4x128xf32, #tpu.memory_space<vmem>>, vector<1x4x128xf32>
    tpu.vector_store %arg5[%c0_7, %c0_8, %c0_9], %15 {strides = array<i32>} : memref<1x4x128xf32, #tpu.memory_space<vmem>>, vector<1x4x128xf32>,
    return
  }
  func.func @transform_0(%arg0: i32, %arg1: i32) -> (i32, i32, i32) {
    %c0_i32 = arith.constant 0 : i32
    %c0_i32_0 = arith.constant 0 : i32
    %c0_i32_1 = arith.constant 0 : i32
    %c0_i32_2 = arith.constant 0 : i32
    return %c0_i32, %c0_i32_0, %c0_i32_1 : i32, i32, i32
  }
  func.func @transform_1(%arg0: i32, %arg1: i32) -> i32 {
    %c0_i32 = arith.constant 0 : i32
    %c0_i32_0 = arith.constant 0 : i32
    return %c0_i32 : i32
  }
  func.func @transform_2(%arg0: i32, %arg1: i32) -> (i32, i32, i32) {
    %c0_i32 = arith.constant 0 : i32
    %c0_i32_0 = arith.constant 0 : i32
    return %arg0, %c0_i32, %arg1 : i32, i32, i32
  }
  func.func @transform_3(%arg0: i32, %arg1: i32) -> (i32, i32, i32) {
    %c0_i32 = arith.constant 0 : i32
    %c0_i32_0 = arith.constant 0 : i32
    return %arg0, %c0_i32, %arg1 : i32, i32, i32
  }
}

</mosaic_0001>

<llo_original>
// kernel: tpu_custom_call.1
$region0: #{tpu_custom_call.1}
  #allocation0 [shape = 'u32[]', space=smem, size = 0x4, offset = 0x4, fixed_abs, tag = 'smem constant byte address 0x4 - core index']
  #allocation1 [shape = 'u32[72,128]{1,0:T(1,128)}', space=vmem, size = 0x9000, scoped, tag = 'internal scratch']
  #allocation2 [shape = 'f32[1]{0:T(128)S(6)}', space=smem, size = 0x200, scoped, tag = 'scoped memory for tpu_custom_call.1']
  %s0 = inlined_call_operand.vmem [shape: f32[1,4,1], index: 0, kind: input, shape index: {}]
  %s1 = inlined_call_operand.<no memory space> [shape: f32[1], index: 1, kind: input, shape index: {}]
  %s2 = inlined_call_operand.hbm [shape: f32[2,4,256], index: 2, kind: input, shape index: {}]
  %s3 = inlined_call_operand.hbm [shape: f32[2,4,256], index: 3, kind: output, shape index: {}]
  %s4 = sld [smem:[#allocation0]]
  $region49: #{tpu_custom_call.1} parent=0
    _
  %s6 = ssub.s32 1, %s4
  %s7 = scalar_select 0, %s6, %s4
  %8 = sst [smem:[#allocation2]] %s1
  $region1: #{tpu_custom_call.1} parent=0
    #allocation3 [shape = 'u8[4096]{0}', space=vmem, size = 0x1000, scoped, tag = 'input window, operand 2']
    #allocation4 [shape = 's32[2]{0}', space=sflag, size = 0x8, scoped, tag = 'scoped memory for tpu_custom_call.1']
    #allocation5 [shape = 's32[2]{0}', space=sflag, size = 0x8, scoped, tag = 'scoped memory for tpu_custom_call.1']
    #allocation6 [shape = 'u8[4096]{0}', space=vmem, size = 0x1000, scoped, tag = 'output window, operand 0']
    %9 = vsyncpa [#allocation4], 0
    %s10 = scalar_lea.sflag [#allocation4], 1
    %11 = vsyncpa %s10, 0
    %12 = vsyncpa [#allocation5], 0
    %s13 = scalar_lea.sflag [#allocation5], 1
    %14 = vsyncpa %s13, 0
    loop: start=0, step=1, limit=6
    $region2: #{tpu_custom_call.1} parent=1 // loop_pre_header
      _
    $region3: #{tpu_custom_call.1} parent=1 // loop_header
      %s16 = sphi 0, %s20
      %p17 = scmp.ge.s32.totalorder %s16, 6
      %s23 = sphi 0, %s35
      %s24 = sphi 0, %s31
      %s25 = sphi 0, %s23
      %s26 = sphi 0, %s24
      %s27 = sphi 0, %s25
      %s28 = sphi 0, %s26
      %s36 = sphi 0, %s36
      %s38 = sphi 0, %s36
      %s39 = sphi 0, %s38
      %s53 = sphi 0, %s39
      %s57 = sphi 0, %s57
      %s59 = sphi 0, %s57
      %s60 = sphi 0, %s59
      %s74 = sphi 0, %s60
      %s82 = sphi 0, %s84
      %s85 = sphi 0, %s82
      %s86 = sphi 0, %s85
      %s102 = sphi 0, %s86
      %s110 = sphi 0, %s112
      %s113 = sphi 0, %s110
      %s114 = sphi 0, %s113
      %s130 = sphi 0, %s114
    $region4: #{tpu_custom_call.1} parent=1 // loop_header_branch
      %19 = sbr.rel (%p17) target = $region8
    $region5: #{tpu_custom_call.1} parent=1 // loop_body
      %s21 = ssub.s32 %s16, 1
      %s22 = ssub.s32 %s16, 2
      %s29 = sadd.s32 1, %s24
      %p30 = scmp.ge.s32.totalorder %s29, 2
      %s31 = scalar_select %p30, 0, %s29
      %s32 = sadd.s32 1, %s23
      %s33 = scalar_select %p30, %s32, %s23
      %p34 = scmp.ge.s32.totalorder %s33, 2
      %s35 = scalar_select %p34, 0, %s33
      %s37 = sadd.s32 %s36, 1
      %p40 = scmp.eq.s32.totalorder %s16, 3
      %p41 = scmp.ne.s32.totalorder %s36, %s38
      %p42 = scmp.eq.s32.totalorder %s16, 0
      %p43 = por %p41, %p42
      %p44 = scmp.ne.s32.totalorder %s36, %s38
      %p45 = scmp.eq.s32.totalorder %s21, 3
      %p46 = por %p44, %p45
      %p47 = scmp.ne.s32.totalorder %s38, %s39
      %p48 = scmp.eq.s32.totalorder %s21, 0
      %p49 = por %p47, %p48
      %p50 = scmp.ne.s32.totalorder %s38, %s39
      %p51 = scmp.eq.s32.totalorder %s22, 3
      %p52 = por %p50, %p51
      %p54 = scmp.ne.s32.totalorder %s39, %s53
      %p55 = scmp.eq.s32.totalorder %s22, 0
      %p56 = por %p54, %p55
      %s58 = sadd.s32 %s57, 1
      %p61 = scmp.eq.s32.totalorder %s16, 3
      %p62 = scmp.ne.s32.totalorder %s57, %s59
      %p63 = scmp.eq.s32.totalorder %s16, 0
      %p64 = por %p62, %p63
      %p65 = scmp.ne.s32.totalorder %s57, %s59
      %p66 = scmp.eq.s32.totalorder %s21, 3
      %p67 = por %p65, %p66
      %p68 = scmp.ne.s32.totalorder %s59, %s60
      %p69 = scmp.eq.s32.totalorder %s21, 0
      %p70 = por %p68, %p69
      %p71 = scmp.ne.s32.totalorder %s59, %s60
      %p72 = scmp.eq.s32.totalorder %s22, 3
      %p73 = por %p71, %p72
      %p75 = scmp.ne.s32.totalorder %s60, %s74
      %p76 = scmp.eq.s32.totalorder %s22, 0
      %p77 = por %p75, %p76
      %s78 = ssub.s32 %s23, %s35
      %s79 = ssub.s32 %s24, %s31
      %s80 = sor.u32 %s78, %s79
      %p81 = scmp.eq.s32.totalorder %s80, 0
      %s83 = sadd.s32 %s82, 1
      %s84 = scalar_select %p81, %s82, %s83
      %p87 = pneg %p81
      %p88 = scmp.eq.s32.totalorder %s16, 3
      %p89 = por %p87, %p88
      %p90 = scmp.ne.s32.totalorder %s82, %s85
      %p91 = scmp.eq.s32.totalorder %s16, 0
      %p92 = por %p90, %p91
      %p93 = scmp.ne.s32.totalorder %s82, %s85
      %p94 = scmp.eq.s32.totalorder %s21, 3
      %p95 = por %p93, %p94
      %p96 = scmp.ne.s32.totalorder %s85, %s86
      %p97 = scmp.eq.s32.totalorder %s21, 0
      %p98 = por %p96, %p97
      %p99 = scmp.ne.s32.totalorder %s85, %s86
      %p100 = scmp.eq.s32.totalorder %s22, 3
      %p101 = por %p99, %p100
      %p103 = scmp.ne.s32.totalorder %s86, %s102
      %p104 = scmp.eq.s32.totalorder %s22, 0
      %p105 = por %p103, %p104
      %s106 = ssub.s32 %s23, %s35
      %s107 = ssub.s32 %s24, %s31
      %s108 = sor.u32 %s106, %s107
      %p109 = scmp.eq.s32.totalorder %s108, 0
      %s111 = sadd.s32 %s110, 1
      %s112 = scalar_select %p109, %s110, %s111
      %p115 = pneg %p109
      %p116 = scmp.eq.s32.totalorder %s16, 3
      %p117 = por %p115, %p116
      %p118 = scmp.ne.s32.totalorder %s110, %s113
      %p119 = scmp.eq.s32.totalorder %s16, 0
      %p120 = por %p118, %p119
      %p121 = scmp.ne.s32.totalorder %s110, %s113
      %p122 = scmp.eq.s32.totalorder %s21, 3
      %p123 = por %p121, %p122
      %p124 = scmp.ne.s32.totalorder %s113, %s114
      %p125 = scmp.eq.s32.totalorder %s21, 0
      %p126 = por %p124, %p125
      %p127 = scmp.ne.s32.totalorder %s113, %s114
      %p128 = scmp.eq.s32.totalorder %s22, 3
      %p129 = por %p127, %p128
      %p131 = scmp.ne.s32.totalorder %s114, %s130
      %p132 = scmp.eq.s32.totalorder %s22, 0
      %p133 = por %p131, %p132
      %p134 = scmp.le.s32.totalorder 1, %s16
      %p135 = scmp.lt.s32.totalorder %s16, 5
      %p136 = pnand %p134, %p135
      %p137 = pneg %p136
      // Predicated region
      $region9: #{tpu_custom_call.1} parent=5 // pred_check
        _
      $region10: #{tpu_custom_call.1} parent=5 // pred_check_branch
        %139 = sbr.rel (%p136) target = $region12
      $region11: #{tpu_custom_call.1} parent=5 // pred_region
        %s140 = ssub.s32 %s16, 1
        // Predicated region
        $region13: #{tpu_custom_call.1} parent=11 // pred_check
          %p141 = pneg %p49
        $region14: #{tpu_custom_call.1} parent=11 // pred_check_branch
          %143 = sbr.rel (%p141) target = $region16
        $region15: #{tpu_custom_call.1} parent=11 // pred_region
          _
        $region16: #{tpu_custom_call.1} parent=11 // pred_fallthru
          _
        // Predicated region
        $region17: #{tpu_custom_call.1} parent=11 // pred_check
          %p144 = pneg %p70
        $region18: #{tpu_custom_call.1} parent=11 // pred_check_branch
          %146 = sbr.rel (%p144) target = $region20
        $region19: #{tpu_custom_call.1} parent=11 // pred_region
          _
        $region20: #{tpu_custom_call.1} parent=11 // pred_fallthru
          _
      $region12: #{tpu_custom_call.1} parent=5 // pred_fallthru
        _
      %p147 = scmp.lt.s32.totalorder %s16, 4
      // Predicated region
      $region21: #{tpu_custom_call.1} parent=5 // pred_check
        %p148 = pneg %p147
      $region22: #{tpu_custom_call.1} parent=5 // pred_check_branch
        %150 = sbr.rel (%p148) target = $region24
      $region23: #{tpu_custom_call.1} parent=5 // pred_region
        // Predicated region
        $region25: #{tpu_custom_call.1} parent=23 // pred_check
          %p151 = pneg %p92
        $region26: #{tpu_custom_call.1} parent=23 // pred_check_branch
          %153 = sbr.rel (%p151) target = $region28
        $region27: #{tpu_custom_call.1} parent=23 // pred_region
          %s154 = sand.u32 %s82, 1
          %s155 = scalar_lea.sflag [#allocation4], %s154
          %s156 = sand.u32 %s82, 1
          %s157 = smul.addr %s156, 4
          %s158 = scalar_lea.vmem [#allocation3], %s157
          %160 = vsyncadd %s155, 0
          %s161 = smul.addr %s23, 2
          %s162 = sadd.s32 %s24, %s161
          %s163 = smul.addr %s162, 4
          %s164 = scalar_lea.hbm %s2, %s163
          %s166 = sshll.u32 %s164, 4
          %s167 = int_to_ptr.hbm [resolvable:$true] %s166
          %s168 = sshll.u32 %s158, 4
          %s169 = int_to_ptr.vmem [resolvable:$true] %s168
          %171 = dma.hbm_to_vmem [thread:$0]  %s167, 64, %s169, %s155
        $region28: #{tpu_custom_call.1} parent=23 // pred_fallthru
          _
      $region24: #{tpu_custom_call.1} parent=5 // pred_fallthru
        _
      %p172 = scmp.le.s32.totalorder 1, %s16
      %p173 = scmp.lt.s32.totalorder %s16, 5
      %p174 = pnand %p172, %p173
      %p175 = pneg %p174
      // Predicated region
      $region29: #{tpu_custom_call.1} parent=5 // pred_check
        _
      $region30: #{tpu_custom_call.1} parent=5 // pred_check_branch
        %177 = sbr.rel (%p174) target = $region32
      $region31: #{tpu_custom_call.1} parent=5 // pred_region
        %s178 = ssub.s32 %s16, 1
        %s179 = sand.u32 %s85, 1
        %s180 = scalar_lea.sflag [#allocation4], %s179
        %s181 = sand.u32 %s85, 1
        %s182 = smul.addr %s181, 4
        %s183 = scalar_lea.vmem [#allocation3], %s182
        // Predicated region
        $region33: #{tpu_custom_call.1} parent=31 // pred_check
          %p184 = pneg %p98
        $region34: #{tpu_custom_call.1} parent=31 // pred_check_branch
          %186 = sbr.rel (%p184) target = $region36
        $region35: #{tpu_custom_call.1} parent=31 // pred_region
          %188 = dma.done %s180, 64
        $region36: #{tpu_custom_call.1} parent=31 // pred_fallthru
          _
        %p189 = pneg %p49
        %p190 = pneg %p46
        %p191 = pneg %p70
        %p192 = pneg %p67
        %s193 = sand.u32 %s85, 1
        %s194 = scalar_lea.sflag [#allocation4], %s193
        %s195 = sand.u32 %s85, 1
        %s196 = smul.addr %s195, 4
        %s197 = scalar_lea.vmem [#allocation3], %s196
        %p198 = pneg %p98
        %p199 = pneg %p95
        %p200 = pneg %p126
        %p201 = pneg %p123
        %s202 = sand.u32 %s113, 1
        %s203 = scalar_lea.sflag [#allocation5], %s202
        %s204 = sand.u32 %s113, 1
        %s205 = smul.addr %s204, 4
        %s206 = scalar_lea.vmem [#allocation6], %s205
        %v207 = vld [vmem:[%s183] sm:$0xf]
        %v208 = vld [vmem:[%s0] sm:$0xf]
        %s209 = sld [smem:[#allocation2]]
        %211 = vset.pattern.permute.xlu0 0
        %212 = vperm.xlu0 %211, %v208
        %v213 = vpop.permute.xlu0 %212
        %v215 = vmul.f32 %v207, %v213
        %vm216 = vcmask 1043456
        %v217 = vsel %vm216, %v215, 0.0
        %v218 = vrot.slane %v217, 4
        %v219 = vadd.f32 %v217, %v218
        %v220 = vrot.slane %v219, 2
        %v221 = vadd.f32 %v219, %v220
        %v222 = vrot.slane %v221, 1
        %v223 = vadd.f32 %v221, %v222
        %v224 = vstv %s209
        %v225 = vadd.f32 %v223, %v224
        %v226 = vxor.u32 %v225, 2147483648
        %v227 = vmul.f32 %v226, 1.442695
        %v228 = vpow.pop %v227
        %v229 = vadd.f32 %v228, 1.0
        %v230 = vrcp.pop %v229
        %v231 = vmul.f32 %v229, %v230
        %v232 = vsub.f32 1.0, %v231
        %v233 = vmul.f32 %v230, %v232
        %v234 = vadd.f32 %v230, %v233
        %vm235 = vweird.f32 %v229
        %vm236 = vweird.f32 %v230
        %vm237 = vmor %vm235, %vm236
        %v238 = vsel %vm237, %v230, %v234
        %v239 = vand.u32 2147483647, %v229
        %vm240 = vcmp.eq.f32.partialorder %v239, 8.507059e+37
        %v241 = vand.u32 %v229, 2147483648
        %v242 = vor.u32 1.1754944e-38, %v241
        %v243 = vsel %vm240, %v242, %v238
        %v244 = vmul.f32 1.0, %v243
        %v245 = vmul.f32 %v244, %v207
        %246 = vst [vmem:[%s206] sm:$0xf] %v245
        %s247 = sand.u32 %s113, 1
        %s248 = scalar_lea.sflag [#allocation5], %s247
        %s249 = sand.u32 %s113, 1
        %s250 = smul.addr %s249, 4
        %s251 = scalar_lea.vmem [#allocation6], %s250
        // Predicated region
        $region37: #{tpu_custom_call.1} parent=31 // pred_check
          %p252 = pneg %p123
        $region38: #{tpu_custom_call.1} parent=31 // pred_check_branch
          %254 = sbr.rel (%p252) target = $region40
        $region39: #{tpu_custom_call.1} parent=31 // pred_region
          %256 = vsyncadd %s248, 0
          %s257 = smul.addr %s25, 2
          %s258 = sadd.s32 %s26, %s257
          %s259 = smul.addr %s258, 4
          %s260 = scalar_lea.hbm %s3, %s259
          %s262 = sshll.u32 %s251, 4
          %s263 = int_to_ptr.vmem [resolvable:$true] %s262
          %s264 = sshll.u32 %s260, 4
          %s265 = int_to_ptr.hbm [resolvable:$true] %s264
          %267 = dma.vmem_to_hbm [thread:$0]  %s263, 64, %s265, %s248
        $region40: #{tpu_custom_call.1} parent=31 // pred_fallthru
          _
      $region32: #{tpu_custom_call.1} parent=5 // pred_fallthru
        _
      %p268 = scmp.le.s32.totalorder 2, %s16
      // Predicated region
      $region41: #{tpu_custom_call.1} parent=5 // pred_check
        %p269 = pneg %p268
      $region42: #{tpu_custom_call.1} parent=5 // pred_check_branch
        %271 = sbr.rel (%p269) target = $region44
      $region43: #{tpu_custom_call.1} parent=5 // pred_region
        %s272 = ssub.s32 %s16, 2
        // Predicated region
        $region45: #{tpu_custom_call.1} parent=43 // pred_check
          %p273 = pneg %p129
        $region46: #{tpu_custom_call.1} parent=43 // pred_check_branch
          %275 = sbr.rel (%p273) target = $region48
        $region47: #{tpu_custom_call.1} parent=43 // pred_region
          %s276 = sand.u32 %s114, 1
          %s277 = scalar_lea.sflag [#allocation5], %s276
          %s278 = sand.u32 %s114, 1
          %s279 = smul.addr %s278, 4
          %s280 = scalar_lea.vmem [#allocation6], %s279
          %282 = dma.done %s277, 64
        $region48: #{tpu_custom_call.1} parent=43 // pred_fallthru
          _
      $region44: #{tpu_custom_call.1} parent=5 // pred_fallthru
        _
    $region6: #{tpu_custom_call.1} parent=1 // loop_footer
      %s20 = sadd.s32 1, %s16
    $region7: #{tpu_custom_call.1} parent=1 // loop_footer_branch
      %15 = sbr.rel target = $region3
    $region8: #{tpu_custom_call.1} parent=1 // loop_exit
      _
    %283 = vsyncpa [#allocation4], 1
    %s284 = scalar_lea.sflag [#allocation4], 1
    %285 = vsyncpa %s284, 1
    %286 = vsyncpa [#allocation5], 1
    %s287 = scalar_lea.sflag [#allocation5], 1
    %288 = vsyncpa %s287, 1

</llo_original>
